<compile_context>
chip_gen: v6e
topology: v6e:2x2x1
jax: 0.10.0
libtpu: 0.0.40
codegen_flags: <defaults>
</compile_context>

<pallas_src>
import jax
import jax.numpy as jnp
from jax.experimental import pallas as pl
from jax.experimental.pallas import tpu as pltpu  # noqa: F401 (TPU backend)

LANE = 128  # TPU lane width; weight/bias output dims are padded to this.


def _rup(n: int) -> int:
    return ((n + LANE - 1) // LANE) * LANE


def policy_mlp_kernel(x_ref, w1_ref, b1_ref, w2_ref, b2_ref, w3_ref, b3_ref,
                      o_ref):
    # fc1 -> ReLU -> fc2 -> ReLU -> fc3  (bf16 MXU operands, f32 accumulate).
    x = x_ref[...].astype(jnp.bfloat16)
    h1 = jnp.dot(x, w1_ref[...], preferred_element_type=jnp.float32) + b1_ref[...]
    h1 = jnp.maximum(h1, 0.0)
    h2 = jnp.dot(h1.astype(jnp.bfloat16), w2_ref[...],
                 preferred_element_type=jnp.float32) + b2_ref[...]
    h2 = jnp.maximum(h2, 0.0)
    logits = jnp.dot(h2.astype(jnp.bfloat16), w3_ref[...],
                     preferred_element_type=jnp.float32) + b3_ref[...]

    # nn.Softmax(dim=0): normalize over the batch axis, per action column.
    # Computed directly on the in-vreg logits; one lane-dense store to o_ref.
    m = jnp.max(logits, axis=0, keepdims=True)
    e = jnp.exp(logits - m)
    denom = jnp.sum(e, axis=0, keepdims=True)
    o_ref[...] = e / denom  # exact division: columns sum to 1 at f32 precision


def _pad_to(a, shape, dtype):
    out = jnp.zeros(shape, dtype)
    return out.at[tuple(slice(0, s) for s in a.shape)].set(a.astype(dtype))


def prepare_params(w1, b1, w2, b2, w3, b3):
    """One-time prep: weights -> bf16, biases -> f32 rows; pad OUTPUT feature
    dims (hidden / n_actions) to a lane multiple.  The fc1 contraction dim
    (n_states) is left unpadded so x streams unpadded."""
    n_states, hidden = w1.shape
    n_actions = w3.shape[1]
    H, A = _rup(hidden), _rup(n_actions)
    return (
        _pad_to(w1, (n_states, H), jnp.bfloat16),
        _pad_to(b1.reshape(1, -1), (1, H), jnp.float32),
        _pad_to(w2, (H, H), jnp.bfloat16),
        _pad_to(b2.reshape(1, -1), (1, H), jnp.float32),
        _pad_to(w3, (H, A), jnp.bfloat16),
        _pad_to(b3.reshape(1, -1), (1, A), jnp.float32),
    )


def policy_mlp_forward(x, params, n_actions):
    w1p, b1p, w2p, b2p, w3p, b3p = params
    B, n_states = x.shape
    H = w1p.shape[1]
    A = w3p.shape[1]

    # Everything (x, params, padded output) is VMEM-resident for the one step.
    vmem_bytes = (x.size * 4
                  + 2 * (w1p.size + w2p.size + w3p.size)
                  + 4 * (b1p.size + b2p.size + b3p.size)
                  + 2 * B * A * 4)
    assert vmem_bytes < 24 * (1 << 20), "single-step design exceeds VMEM budget"

    full = lambda shape: pl.BlockSpec(shape, lambda i: (0, 0))

    out_padded = pl.pallas_call(
        policy_mlp_kernel,
        out_shape=jax.ShapeDtypeStruct((B, A), jnp.float32),
        grid=(1,),  # single step: no pipeline overhead, no redundant DMAs
        in_specs=[
            full((B, n_states)),                 # x, unpadded (block == array)
            full((n_states, H)), full((1, H)),   # fc1
            full((H, H)), full((1, H)),          # fc2
            full((H, A)), full((1, A)),          # fc3
        ],
        out_specs=full((B, A)),                  # lane-dense (A = 128) store
    )(x, w1p, b1p, w2p, b2p, w3p, b3p)

    # The padded action columns are softmaxes of all-zero logits -> discard.
    # (If the consumer tolerates the (B, 128) lane-padded output, drop this
    # slice to save one HBM pass.)
    return out_padded[:, :n_actions]


def init_linear(key, fan_in, fan_out):
    # torch.nn.Linear default init: U(-1/sqrt(fan_in), +1/sqrt(fan_in))
    kw, kb = jax.random.split(key)
    bound = 1.0 / jnp.sqrt(fan_in)
    w = jax.random.uniform(kw, (fan_in, fan_out), jnp.float32, -bound, bound)
    b = jax.random.uniform(kb, (fan_out,), jnp.float32, -bound, bound)
    return w, b


def reference_forward(x, w1, b1, w2, b2, w3, b3):
    # Pure-JAX reference with the same bf16 operand quantization as the kernel
    # (f32 math otherwise), so only accumulation order differs.
    q = lambda a: a.astype(jnp.bfloat16).astype(jnp.float32)
    h1 = jnp.maximum(q(x) @ q(w1) + b1, 0.0)
    h2 = jnp.maximum(q(h1) @ q(w2) + b2, 0.0)
    logits = q(h2) @ q(w3) + b3
    return jax.nn.softmax(logits, axis=0)


if __name__ == "__main__":
    B, n_states, hidden_size, n_actions = 64, 16, 32, 8

    key = jax.random.PRNGKey(0)
    kx, k1, k2, k3 = jax.random.split(key, 4)

    x = jax.random.normal(kx, (B, n_states), jnp.float32)
    w1, b1 = init_linear(k1, n_states, hidden_size)
    w2, b2 = init_linear(k2, hidden_size, hidden_size)
    w3, b3 = init_linear(k3, hidden_size, n_actions)

    params = prepare_params(w1, b1, w2, b2, w3, b3)
    out = policy_mlp_forward(x, params, n_actions)
    out = jax.block_until_ready(out)

    ref = reference_forward(x, w1, b1, w2, b2, w3, b3)
    assert out.shape == (B, n_actions)
    # Tolerance covers bf16 matmul operands vs the f32 PyTorch module.
    assert jnp.allclose(out, ref, atol=1e-2, rtol=1e-2), float(
        jnp.max(jnp.abs(out - ref)))
    # nn.Softmax(dim=0) invariant: each action column sums to 1 over the batch
    # (exact division in the kernel -> f32-precision tolerance).
    assert jnp.allclose(out.sum(axis=0), 1.0, atol=1e-5)

    print("KERNEL_OK")
</pallas_src>

<mosaic_0001>
module attributes {stable_mosaic.version = 11 : i64} {
  func.func @policy_mlp_kernel(%arg0: i32, %arg1: memref<64x16xf32, #tpu.memory_space<vmem>>, %arg2: memref<16x128xbf16, #tpu.memory_space<vmem>>, %arg3: memref<1x128xf32, #tpu.memory_space<vmem>>, %arg4: memref<128x128xbf16, #tpu.memory_space<vmem>>, %arg5: memref<1x128xf32, #tpu.memory_space<vmem>>, %arg6: memref<128x128xbf16, #tpu.memory_space<vmem>>, %arg7: memref<1x128xf32, #tpu.memory_space<vmem>>, %arg8: memref<64x128xf32, #tpu.memory_space<vmem>>) attributes {dimension_semantics = [#tpu.dimension_semantics<arbitrary>], iteration_bounds = array<i64: 1>, scalar_prefetch = 0 : i64, scratch_operands = 0 : i64, tpu.core_type = #tpu.core_type<tc>, window_params = [{pipeline_mode = #tpu.pipeline_mode<synchronous>, transform_indices = @transform_0, window_bounds = array<i64: 64, 16>}, {pipeline_mode = #tpu.pipeline_mode<synchronous>, transform_indices = @transform_1, window_bounds = array<i64: 16, 128>}, {pipeline_mode = #tpu.pipeline_mode<synchronous>, transform_indices = @transform_2, window_bounds = array<i64: 1, 128>}, {pipeline_mode = #tpu.pipeline_mode<synchronous>, transform_indices = @transform_3, window_bounds = array<i64: 128, 128>}, {pipeline_mode = #tpu.pipeline_mode<synchronous>, transform_indices = @transform_4, window_bounds = array<i64: 1, 128>}, {pipeline_mode = #tpu.pipeline_mode<synchronous>, transform_indices = @transform_5, window_bounds = array<i64: 128, 128>}, {pipeline_mode = #tpu.pipeline_mode<synchronous>, transform_indices = @transform_6, window_bounds = array<i64: 1, 128>}, {pipeline_mode = #tpu.pipeline_mode<synchronous>, transform_indices = @transform_7, window_bounds = array<i64: 64, 128>}]} {
    %c0 = arith.constant 0 : index
    %c0_0 = arith.constant 0 : index
    %0 = vector.load %arg1[%c0, %c0_0] : memref<64x16xf32, #tpu.memory_space<vmem>>, vector<64x16xf32>
    %1 = arith.truncf %0 : vector<64x16xf32> to vector<64x16xbf16>
    %c0_1 = arith.constant 0 : index
    %c0_2 = arith.constant 0 : index
    %2 = vector.load %arg2[%c0_1, %c0_2] : memref<16x128xbf16, #tpu.memory_space<vmem>>, vector<16x128xbf16>
    %cst = arith.constant dense<0.000000e+00> : vector<64x128xf32>
    %3 = tpu.matmul %1, %2, %cst {dimension_numbers = #tpu.dot_dimension_numbers<[1], [0], [0], [1], [0, 0, 1, 1], [], []>} : vector<64x16xbf16>, vector<16x128xbf16>, vector<64x128xf32> -> vector<64x128xf32>
    %c0_3 = arith.constant 0 : index
    %c0_4 = arith.constant 0 : index
    %4 = vector.load %arg3[%c0_3, %c0_4] : memref<1x128xf32, #tpu.memory_space<vmem>>, vector<1x128xf32>
    %5 = vector.broadcast %4 : vector<1x128xf32> to vector<64x128xf32>
    %6 = arith.addf %3, %5 : vector<64x128xf32>
    %cst_5 = arith.constant 0.000000e+00 : f32
    %7 = vector.broadcast %cst_5 : f32 to vector<64x128xf32>
    %8 = arith.maximumf %6, %7 : vector<64x128xf32>
    %9 = arith.truncf %8 : vector<64x128xf32> to vector<64x128xbf16>
    %c0_6 = arith.constant 0 : index
    %c0_7 = arith.constant 0 : index
    %10 = vector.load %arg4[%c0_6, %c0_7] : memref<128x128xbf16, #tpu.memory_space<vmem>>, vector<128x128xbf16>
    %cst_8 = arith.constant dense<0.000000e+00> : vector<64x128xf32>
    %11 = tpu.matmul %9, %10, %cst_8 {dimension_numbers = #tpu.dot_dimension_numbers<[1], [0], [0], [1], [0, 0, 1, 1], [], []>} : vector<64x128xbf16>, vector<128x128xbf16>, vector<64x128xf32> -> vector<64x128xf32>
    %c0_9 = arith.constant 0 : index
    %c0_10 = arith.constant 0 : index
    %12 = vector.load %arg5[%c0_9, %c0_10] : memref<1x128xf32, #tpu.memory_space<vmem>>, vector<1x128xf32>
    %13 = vector.broadcast %12 : vector<1x128xf32> to vector<64x128xf32>
    %14 = arith.addf %11, %13 : vector<64x128xf32>
    %cst_11 = arith.constant 0.000000e+00 : f32
    %15 = vector.broadcast %cst_11 : f32 to vector<64x128xf32>
    %16 = arith.maximumf %14, %15 : vector<64x128xf32>
    %17 = arith.truncf %16 : vector<64x128xf32> to vector<64x128xbf16>
    %c0_12 = arith.constant 0 : index
    %c0_13 = arith.constant 0 : index
    %18 = vector.load %arg6[%c0_12, %c0_13] : memref<128x128xbf16, #tpu.memory_space<vmem>>, vector<128x128xbf16>
    %cst_14 = arith.constant dense<0.000000e+00> : vector<64x128xf32>
    %19 = tpu.matmul %17, %18, %cst_14 {dimension_numbers = #tpu.dot_dimension_numbers<[1], [0], [0], [1], [0, 0, 1, 1], [], []>} : vector<64x128xbf16>, vector<128x128xbf16>, vector<64x128xf32> -> vector<64x128xf32>
    %c0_15 = arith.constant 0 : index
    %c0_16 = arith.constant 0 : index
    %20 = vector.load %arg7[%c0_15, %c0_16] : memref<1x128xf32, #tpu.memory_space<vmem>>, vector<1x128xf32>
    %21 = vector.broadcast %20 : vector<1x128xf32> to vector<64x128xf32>
    %22 = arith.addf %19, %21 : vector<64x128xf32>
    %cst_17 = arith.constant dense<0xFF800000> : vector<128xf32>
    %23 = vector.multi_reduction <maximumf>, %22, %cst_17 [0] : vector<64x128xf32> to vector<128xf32>
    %24 = vector.shape_cast %23 : vector<128xf32> to vector<1x128xf32>
    %25 = vector.broadcast %24 : vector<1x128xf32> to vector<64x128xf32>
    %26 = arith.subf %22, %25 : vector<64x128xf32>
    %27 = math.exp %26 : vector<64x128xf32>
    %cst_18 = arith.constant dense<0.000000e+00> : vector<128xf32>
    %28 = vector.multi_reduction <add>, %27, %cst_18 [0] : vector<64x128xf32> to vector<128xf32>
    %29 = vector.shape_cast %28 : vector<128xf32> to vector<1x128xf32>
    %30 = vector.broadcast %29 : vector<1x128xf32> to vector<64x128xf32>
    %31 = arith.divf %27, %30 : vector<64x128xf32>
    %c0_19 = arith.constant 0 : index
    %c0_20 = arith.constant 0 : index
    %32 = vector.load %arg8[%c0_19, %c0_20] : memref<64x128xf32, #tpu.memory_space<vmem>>, vector<64x128xf32>
    tpu.vector_store %arg8[%c0_19, %c0_20], %31 {strides = array<i32>} : memref<64x128xf32, #tpu.memory_space<vmem>>, vector<64x128xf32>,
    return
  }
  func.func @transform_0(%arg0: i32) -> (i32, i32) {
    %c0_i32 = arith.constant 0 : i32
    %c0_i32_0 = arith.constant 0 : i32
    %c0_i32_1 = arith.constant 0 : i32
    return %c0_i32, %c0_i32_0 : i32, i32
  }
  func.func @transform_1(%arg0: i32) -> (i32, i32) {
    %c0_i32 = arith.constant 0 : i32
    %c0_i32_0 = arith.constant 0 : i32
    %c0_i32_1 = arith.constant 0 : i32
    return %c0_i32, %c0_i32_0 : i32, i32
  }
  func.func @transform_2(%arg0: i32) -> (i32, i32) {
    %c0_i32 = arith.constant 0 : i32
    %c0_i32_0 = arith.constant 0 : i32
    %c0_i32_1 = arith.constant 0 : i32
    return %c0_i32, %c0_i32_0 : i32, i32
  }
  func.func @transform_3(%arg0: i32) -> (i32, i32) {
    %c0_i32 = arith.constant 0 : i32
    %c0_i32_0 = arith.constant 0 : i32
    %c0_i32_1 = arith.constant 0 : i32
    return %c0_i32, %c0_i32_0 : i32, i32
  }
  func.func @transform_4(%arg0: i32) -> (i32, i32) {
    %c0_i32 = arith.constant 0 : i32
    %c0_i32_0 = arith.constant 0 : i32
    %c0_i32_1 = arith.constant 0 : i32
    return %c0_i32, %c0_i32_0 : i32, i32
  }
  func.func @transform_5(%arg0: i32) -> (i32, i32) {
    %c0_i32 = arith.constant 0 : i32
    %c0_i32_0 = arith.constant 0 : i32
    %c0_i32_1 = arith.constant 0 : i32
    return %c0_i32, %c0_i32_0 : i32, i32
  }
  func.func @transform_6(%arg0: i32) -> (i32, i32) {
    %c0_i32 = arith.constant 0 : i32
    %c0_i32_0 = arith.constant 0 : i32
    %c0_i32_1 = arith.constant 0 : i32
    return %c0_i32, %c0_i32_0 : i32, i32
  }
  func.func @transform_7(%arg0: i32) -> (i32, i32) {
    %c0_i32 = arith.constant 0 : i32
    %c0_i32_0 = arith.constant 0 : i32
    %c0_i32_1 = arith.constant 0 : i32
    return %c0_i32, %c0_i32_0 : i32, i32
  }
}

</mosaic_0001>

<llo_original>
// kernel: tpu_custom_call.1
$region0: #{tpu_custom_call.1}
  #allocation0 [shape = 'u32[]', space=smem, size = 0x4, offset = 0x4, fixed_abs, tag = 'smem constant byte address 0x4 - core index']
  #allocation1 [shape = 'u32[144,128]{1,0:T(1,128)}', space=vmem, size = 0x12000, scoped, tag = 'internal scratch']
  %s0 = inlined_call_operand.vmem [shape: f32[64,16], index: 0, kind: input, shape index: {}]
  %s1 = inlined_call_operand.vmem [shape: bf16[16,128], index: 1, kind: input, shape index: {}]
  %s2 = inlined_call_operand.vmem [shape: f32[1,128], index: 2, kind: input, shape index: {}]
  %s3 = inlined_call_operand.vmem [shape: bf16[128,128], index: 3, kind: input, shape index: {}]
  %s4 = inlined_call_operand.vmem [shape: f32[1,128], index: 4, kind: input, shape index: {}]
  %s5 = inlined_call_operand.hbm [shape: bf16[128,128], index: 5, kind: input, shape index: {}]
  %s6 = inlined_call_operand.vmem [shape: f32[1,128], index: 6, kind: input, shape index: {}]
  %s7 = inlined_call_operand.hbm [shape: f32[64,128], index: 7, kind: output, shape index: {}]
  %s8 = sld [smem:[#allocation0]]
  $region42: #{tpu_custom_call.1} parent=0
    _
  %s10 = ssub.s32 1, %s8
  %s11 = scalar_select 0, %s10, %s8
  $region1: #{tpu_custom_call.1} parent=0
    #allocation2 [shape = 'u8[32768]{0}', space=vmem, size = 0x8000, scoped, tag = 'input window, operand 5, single buffered']
    #allocation3 [shape = 's32[1]{0}', space=sflag, size = 0x4, scoped, tag = 'scoped memory for tpu_custom_call.1']
    #allocation4 [shape = 's32[1]{0}', space=sflag, size = 0x4, scoped, tag = 'scoped memory for tpu_custom_call.1']
    #allocation5 [shape = 'u8[32768]{0}', space=vmem, size = 0x8000, scoped, tag = 'output window, operand 0, single buffered']
    %12 = vsyncpa [#allocation3], 0
    %13 = vsyncpa [#allocation4], 0
    // Predicated region
    $region2: #{tpu_custom_call.1} parent=1 // pred_check
      _
    $region3: #{tpu_custom_call.1} parent=1 // pred_check_branch
      %15 = sbr.rel (0) target = $region5
    $region4: #{tpu_custom_call.1} parent=1 // pred_region
      _
    $region5: #{tpu_custom_call.1} parent=1 // pred_fallthru
      _
    // Predicated region
    $region6: #{tpu_custom_call.1} parent=1 // pred_check
      _
    $region7: #{tpu_custom_call.1} parent=1 // pred_check_branch
      %17 = sbr.rel (0) target = $region9
    $region8: #{tpu_custom_call.1} parent=1 // pred_region
      _
    $region9: #{tpu_custom_call.1} parent=1 // pred_fallthru
      _
    // Predicated region
    $region10: #{tpu_custom_call.1} parent=1 // pred_check
      _
    $region11: #{tpu_custom_call.1} parent=1 // pred_check_branch
      %19 = sbr.rel (0) target = $region13
    $region12: #{tpu_custom_call.1} parent=1 // pred_region
      _
    $region13: #{tpu_custom_call.1} parent=1 // pred_fallthru
      _
    // Predicated region
    $region14: #{tpu_custom_call.1} parent=1 // pred_check
      _
    $region15: #{tpu_custom_call.1} parent=1 // pred_check_branch
      %21 = sbr.rel (0) target = $region17
    $region16: #{tpu_custom_call.1} parent=1 // pred_region
      _
    $region17: #{tpu_custom_call.1} parent=1 // pred_fallthru
      _
    // Predicated region
    $region18: #{tpu_custom_call.1} parent=1 // pred_check
      _
    $region19: #{tpu_custom_call.1} parent=1 // pred_check_branch
      %23 = sbr.rel (0) target = $region21
    $region20: #{tpu_custom_call.1} parent=1 // pred_region
      _
    $region21: #{tpu_custom_call.1} parent=1 // pred_fallthru
      _
    // Predicated region
    $region22: #{tpu_custom_call.1} parent=1 // pred_check
      _
    $region23: #{tpu_custom_call.1} parent=1 // pred_check_branch
      %25 = sbr.rel (0) target = $region25
    $region24: #{tpu_custom_call.1} parent=1 // pred_region
      %s27 = ssub.s32 1024, 1024
      %28 = vsyncadd [#allocation3], %s27
      %s29 = sshll.u32 [#allocation2], 4
      %s30 = int_to_ptr.vmem [resolvable:$true] %s29
      %35 = dma.hbm_to_vmem [thread:$0]  %s5, 1024, %s30, [#allocation3], 64, 64, 4
    $region25: #{tpu_custom_call.1} parent=1 // pred_fallthru
      _
    // Predicated region
    $region26: #{tpu_custom_call.1} parent=1 // pred_check
      _
    $region27: #{tpu_custom_call.1} parent=1 // pred_check_branch
      %37 = sbr.rel (0) target = $region29
    $region28: #{tpu_custom_call.1} parent=1 // pred_region
      _
    $region29: #{tpu_custom_call.1} parent=1 // pred_fallthru
      _
    // Predicated region
    $region30: #{tpu_custom_call.1} parent=1 // pred_check
      _
    $region31: #{tpu_custom_call.1} parent=1 // pred_check_branch
      %39 = sbr.rel (0) target = $region33
    $region32: #{tpu_custom_call.1} parent=1 // pred_region
      %40 = dma.done [#allocation3], 1024
    $region33: #{tpu_custom_call.1} parent=1 // pred_fallthru
      _
    %v42 = vld [vmem:[%s0] sm:$0xff]
    %v43 = vld [vmem:[%s0 + $0x8] sm:$0xff]
    %v44 = vld [vmem:[%s0 + $0x10] sm:$0xff]
    %v45 = vld [vmem:[%s0 + $0x18] sm:$0xff]
    %v46 = vld [vmem:[%s0 + $0x20] sm:$0xff]
    %v47 = vld [vmem:[%s0 + $0x28] sm:$0xff]
    %v48 = vld [vmem:[%s0 + $0x30] sm:$0xff]
    %v49 = vld [vmem:[%s0 + $0x38] sm:$0xff]
    %v50 = vpack.c.bf16 %v43, %v42
    %v51 = vpack.c.bf16 %v45, %v44
    %v52 = vpack.c.bf16 %v47, %v46
    %v53 = vpack.c.bf16 %v49, %v48
    %v54 = vld [vmem:[%s1] sm:$0xf]
    %v55 = vld [vmem:[%s1 + $0x4] sm:$0xf]
    %v56 = vld [vmem:[%s2] sm:$0x1]
    %v58 = vlaneseq
    %v59 = vshrl.u32 %v58, 7
    %v60 = vsub.s32 0, %v59
    %v61 = vrot.slane %v56, %v60
    %v65 = vunpack.c.l.b16 %v54
    %v66 = vunpack.c.l.b16 %v55
    %v67 = vpack.c.b16 %v66, %v65
    %vm69 = vcmask 130048
    %v71 = vsel %vm69, %v50, 0
    %v74 = vsel %vm69, %v51, 0
    %v77 = vsel %vm69, %v52, 0
    %v80 = vsel %vm69, %v53, 0
    %82 = vmatprep.subr.bf16.mxu0 0
    %83 = vmatpush1.bf16.msra.mxu0 0
    %84 = vmatprep.subr.bf16.mxu0 0
    %85 = vmatpush1.bf16.msra.mxu0 0
    %86 = vmatprep.subr.bf16.mxu0 0
    %87 = vmatpush1.bf16.msra.mxu0 0
    %88 = vmatprep.subr.bf16.mxu0 0
    %89 = vmatpush1.bf16.msra.mxu0 0
    %90 = vmatprep.subr.bf16.mxu0 0
    %91 = vmatpush1.bf16.msra.mxu0 0
    %92 = vmatprep.subr.bf16.mxu0 0
    %93 = vmatpush1.bf16.msra.mxu0 0
    %94 = vmatprep.subr.bf16.mxu0 0
    %95 = vmatpush1.bf16.msra.mxu0 0
    %96 = vmatprep.subr.bf16.mxu0 0
    %97 = vmatpush1.bf16.msra.mxu0 %v67
    %98 = vmatprep.subr.bf16.mxu0 0
    %99 = vmatpush2.bf16.msra.mxu0 0
    %100 = vmatprep.subr.bf16.mxu0 0
    %101 = vmatpush2.bf16.msra.mxu0 0
    %102 = vmatprep.subr.bf16.mxu0 0
    %103 = vmatpush2.bf16.msra.mxu0 0
    %104 = vmatprep.subr.bf16.mxu0 0
    %105 = vmatpush2.bf16.msra.mxu0 0
    %106 = vmatprep.subr.bf16.mxu0 0
    %107 = vmatpush2.bf16.msra.mxu0 0
    %108 = vmatprep.subr.bf16.mxu0 0
    %109 = vmatpush2.bf16.msra.mxu0 0
    %110 = vmatprep.subr.bf16.mxu0 0
    %111 = vmatpush2.bf16.msra.mxu0 0
    %112 = vmatprep.subr.bf16.mxu0 0
    %113 = vmatpush2.bf16.msra.mxu0 0
    %114 = vmatprep.mubr.bf16.mxu0 0
    %115 = vmatmul.mubr.bf16.gmra.mxu0 %v71
    %v116 = vpop.f32.mrf.mxu0
    %v117 = vadd.f32 %v61, %v116
    %v118 = vpop.f32.mrf.mxu0
    %v119 = vpop.f32.mrf.mxu0
    %v120 = vadd.f32 %v61, %v119
    %v121 = vpop.f32.mrf.mxu0
    %122 = vmatprep.mubr.bf16.mxu0 0
    %123 = vmatmul.mubr.bf16.gmra.mxu0 %v74
    %v124 = vpop.f32.mrf.mxu0
    %v125 = vadd.f32 %v61, %v124
    %v126 = vpop.f32.mrf.mxu0
    %v127 = vpop.f32.mrf.mxu0
    %v128 = vadd.f32 %v61, %v127
    %v129 = vpop.f32.mrf.mxu0
    %130 = vmatprep.mubr.bf16.mxu0 0
    %131 = vmatmul.mubr.bf16.gmra.mxu0 %v77
    %v132 = vpop.f32.mrf.mxu0
    %v133 = vadd.f32 %v61, %v132
    %v134 = vpop.f32.mrf.mxu0
    %v135 = vpop.f32.mrf.mxu0
    %v136 = vadd.f32 %v61, %v135
    %v137 = vpop.f32.mrf.mxu0
    %138 = vmatprep.mubr.bf16.mxu0 0
    %139 = vmatmul.mubr.bf16.gmra.mxu0 %v80
    %v140 = vpop.f32.mrf.mxu0
    %v141 = vadd.f32 %v61, %v140
    %v142 = vpop.f32.mrf.mxu0
    %v143 = vpop.f32.mrf.mxu0
    %v144 = vadd.f32 %v61, %v143
    %v145 = vpop.f32.mrf.mxu0
    %146 = vdwg.mxu0
    %v147 = vmax.f32 %v117, 0.0
    %v148 = vmax.f32 %v120, 0.0
    %v149 = vmax.f32 %v125, 0.0
    %v150 = vmax.f32 %v128, 0.0
    %v151 = vmax.f32 %v133, 0.0
    %v152 = vmax.f32 %v136, 0.0
    %v153 = vmax.f32 %v141, 0.0
    %v154 = vmax.f32 %v144, 0.0
    %v155 = vpack.c.bf16 %v148, %v147
    %v156 = vpack.c.bf16 %v150, %v149
    %v157 = vpack.c.bf16 %v152, %v151
    %v158 = vpack.c.bf16 %v154, %v153
    %v159 = vld [vmem:[%s3] sm:$0xf]
    %v160 = vld [vmem:[%s3 + $0x4] sm:$0xf]
    %v161 = vld [vmem:[%s3 + $0x8] sm:$0xf]
    %v162 = vld [vmem:[%s3 + $0xc] sm:$0xf]
    %v163 = vld [vmem:[%s3 + $0x10] sm:$0xf]
    %v164 = vld [vmem:[%s3 + $0x14] sm:$0xf]
    %v165 = vld [vmem:[%s3 + $0x18] sm:$0xf]
    %v166 = vld [vmem:[%s3 + $0x1c] sm:$0xf]
    %v167 = vld [vmem:[%s3 + $0x20] sm:$0xf]
    %v168 = vld [vmem:[%s3 + $0x24] sm:$0xf]
    %v169 = vld [vmem:[%s3 + $0x28] sm:$0xf]
    %v170 = vld [vmem:[%s3 + $0x2c] sm:$0xf]
    %v171 = vld [vmem:[%s3 + $0x30] sm:$0xf]
    %v172 = vld [vmem:[%s3 + $0x34] sm:$0xf]
    %v173 = vld [vmem:[%s3 + $0x38] sm:$0xf]
    %v174 = vld [vmem:[%s3 + $0x3c] sm:$0xf]
    %v175 = vld [vmem:[%s4] sm:$0x1]
    %v177 = vlaneseq
    %v178 = vshrl.u32 %v177, 7
    %v179 = vsub.s32 0, %v178
    %v180 = vrot.slane %v175, %v179
    %v198 = vunpack.c.l.b16 %v159
    %v199 = vunpack.c.l.b16 %v160
    %v200 = vunpack.c.l.b16 %v161
    %v201 = vunpack.c.l.b16 %v162
    %v202 = vunpack.c.l.b16 %v163
    %v203 = vunpack.c.l.b16 %v164
    %v204 = vunpack.c.l.b16 %v165
    %v205 = vunpack.c.l.b16 %v166
    %v206 = vunpack.c.l.b16 %v167
    %v207 = vunpack.c.l.b16 %v168
    %v208 = vunpack.c.l.b16 %v169
    %v209 = vunpack.c.l.b16 %v170
    %v210 = vunpack.c.l.b16 %v171
    %v211 = vunpack.c.l.b16 %v172
    %v212 = vunpack.c.l.b16 %v173
    %v213 = vunpack.c.l.b16 %v174
    %v214 = vpack.c.b16 %v199, %v198
    %v215 = vpack.c.b16 %v201, %v200
    %v216 = vpack.c.b16 %v203, %v202
    %v217 = vpack.c.b16 %v205, %v204
    %v218 = vpack.c.b16 %v207, %v206
    %v219 = vpack.c.b16 %v209, %v208
    %v220 = vpack.c.b16 %v211, %v210
    %v221 = vpack.c.b16 %v213, %v212
    %230 = vmatprep.subr.bf16.mxu0 0
    %231 = vmatpush1.bf16.msra.mxu0 %v221
    %232 = vmatprep.subr.bf16.mxu0 0
    %233 = vmatpush1.bf16.msra.mxu0 %v220
    %234 = vmatprep.subr.bf16.mxu0 0
    %235 = vmatpush1.bf16.msra.mxu0 %v219
    %236 = vmatprep.subr.bf16.mxu0 0
    %237 = vmatpush1.bf16.msra.mxu0 %v218
    %238 = vmatprep.subr.bf16.mxu0 0
    %239 = vmatpush1.bf16.msra.mxu0 %v217
    %240 = vmatprep.subr.bf16.mxu0 0
    %241 = vmatpush1.bf16.msra.mxu0 %v216
    %242 = vmatprep.subr.bf16.mxu0 0
    %243 = vmatpush1.bf16.msra.mxu0 %v215
    %244 = vmatprep.subr.bf16.mxu0 0
    %245 = vmatpush1.bf16.msra.mxu0 %v214
    %246 = vmatprep.subr.bf16.mxu0 0
    %247 = vmatpush2.bf16.msra.mxu0 0
    %248 = vmatprep.subr.bf16.mxu0 0
    %249 = vmatpush2.bf16.msra.mxu0 0
    %250 = vmatprep.subr.bf16.mxu0 0
    %251 = vmatpush2.bf16.msra.mxu0 0
    %252 = vmatprep.subr.bf16.mxu0 0
    %253 = vmatpush2.bf16.msra.mxu0 0
    %254 = vmatprep.subr.bf16.mxu0 0
    %255 = vmatpush2.bf16.msra.mxu0 0
    %256 = vmatprep.subr.bf16.mxu0 0
    %257 = vmatpush2.bf16.msra.mxu0 0
    %258 = vmatprep.subr.bf16.mxu0 0
    %259 = vmatpush2.bf16.msra.mxu0 0
    %260 = vmatprep.subr.bf16.mxu0 0
    %261 = vmatpush2.bf16.msra.mxu0 0
    %262 = vmatprep.mubr.bf16.mxu0 0
    %263 = vmatmul.mubr.bf16.gmra.mxu0 %v155
    %v264 = vpop.f32.mrf.mxu0
    %v265 = vadd.f32 %v180, %v264
    %v266 = vpop.f32.mrf.mxu0
    %v267 = vpop.f32.mrf.mxu0
    %v268 = vadd.f32 %v180, %v267
    %v269 = vpop.f32.mrf.mxu0
    %270 = vmatprep.mubr.bf16.mxu0 0
    %271 = vmatmul.mubr.bf16.gmra.mxu0 %v156
    %v272 = vpop.f32.mrf.mxu0
    %v273 = vadd.f32 %v180, %v272
    %v274 = vpop.f32.mrf.mxu0
    %v275 = vpop.f32.mrf.mxu0
    %v276 = vadd.f32 %v180, %v275
    %v277 = vpop.f32.mrf.mxu0
    %278 = vmatprep.mubr.bf16.mxu0 0
    %279 = vmatmul.mubr.bf16.gmra.mxu0 %v157
    %v280 = vpop.f32.mrf.mxu0
    %v281 = vadd.f32 %v180, %v280
    %v282 = vpop.f32.mrf.mxu0
    %v283 = vpop.f32.mrf.mxu0
    %v284 = vadd.f32 %v180, %v283
    %v285 = vpop.f32.mrf.mxu0
    %286 = vmatprep.mubr.bf16.mxu0 0
    %287 = vmatmul.mubr.bf16.gmra.mxu0 %v158
    %v288 = vpop.f32.mrf.mxu0
    %v289 = vadd.f32 %v180, %v288
    %v290 = vpop.f32.mrf.mxu0
    %v291 = vpop.f32.mrf.mxu0
    %v292 = vadd.f32 %v180, %v291
    %v293 = vpop.f32.mrf.mxu0
    %294 = vdwg.mxu0
    %v295 = vmax.f32 %v265, 0.0
    %v296 = vmax.f32 %v268, 0.0
    %v297 = vmax.f32 %v273, 0.0
    %v298 = vmax.f32 %v276, 0.0
    %v299 = vmax.f32 %v281, 0.0
    %v300 = vmax.f32 %v284, 0.0
    %v301 = vmax.f32 %v289, 0.0
    %v302 = vmax.f32 %v292, 0.0
    %v303 = vpack.c.bf16 %v296, %v295
    %v304 = vpack.c.bf16 %v298, %v297
    %v305 = vpack.c.bf16 %v300, %v299
    %v306 = vpack.c.bf16 %v302, %v301
    %v307 = vld [vmem:[#allocation2] sm:$0xf]
    %v308 = vld [vmem:[#allocation2 + $0x4] sm:$0xf]
    %v309 = vld [vmem:[#allocation2 + $0x8] sm:$0xf]
    %v310 = vld [vmem:[#allocation2 + $0xc] sm:$0xf]
    %v311 = vld [vmem:[#allocation2 + $0x10] sm:$0xf]
    %v312 = vld [vmem:[#allocation2 + $0x14] sm:$0xf]
    %v313 = vld [vmem:[#allocation2 + $0x18] sm:$0xf]
    %v314 = vld [vmem:[#allocation2 + $0x1c] sm:$0xf]
    %v315 = vld [vmem:[#allocation2 + $0x20] sm:$0xf]
    %v316 = vld [vmem:[#allocation2 + $0x24] sm:$0xf]
    %v317 = vld [vmem:[#allocation2 + $0x28] sm:$0xf]
    %v318 = vld [vmem:[#allocation2 + $0x2c] sm:$0xf]
    %v319 = vld [vmem:[#allocation2 + $0x30] sm:$0xf]
    %v320 = vld [vmem:[#allocation2 + $0x34] sm:$0xf]
    %v321 = vld [vmem:[#allocation2 + $0x38] sm:$0xf]
    %v322 = vld [vmem:[#allocation2 + $0x3c] sm:$0xf]
    %v323 = vld [vmem:[%s6] sm:$0x1]
    %v325 = vlaneseq
    %v326 = vshrl.u32 %v325, 7
    %v327 = vsub.s32 0, %v326
    %v328 = vrot.slane %v323, %v327
    %v346 = vunpack.c.l.b16 %v307
    %v347 = vunpack.c.l.b16 %v308
    %v348 = vunpack.c.l.b16 %v309
    %v349 = vunpack.c.l.b16 %v310
    %v350 = vunpack.c.l.b16 %v311
    %v351 = vunpack.c.l.b16 %v312
    %v352 = vunpack.c.l.b16 %v313
    %v353 = vunpack.c.l.b16 %v314
    %v354 = vunpack.c.l.b16 %v315
    %v355 = vunpack.c.l.b16 %v316
    %v356 = vunpack.c.l.b16 %v317
    %v357 = vunpack.c.l.b16 %v318
    %v358 = vunpack.c.l.b16 %v319
    %v359 = vunpack.c.l.b16 %v320
    %v360 = vunpack.c.l.b16 %v321
    %v361 = vunpack.c.l.b16 %v322
    %v362 = vpack.c.b16 %v347, %v346
    %v363 = vpack.c.b16 %v349, %v348
    %v364 = vpack.c.b16 %v351, %v350
    %v365 = vpack.c.b16 %v353, %v352
    %v366 = vpack.c.b16 %v355, %v354
    %v367 = vpack.c.b16 %v357, %v356
    %v368 = vpack.c.b16 %v359, %v358
    %v369 = vpack.c.b16 %v361, %v360
    %378 = vmatprep.subr.bf16.mxu0 0
    %379 = vmatpush1.bf16.msra.mxu0 %v369
    %380 = vmatprep.subr.bf16.mxu0 0
    %381 = vmatpush1.bf16.msra.mxu0 %v368
    %382 = vmatprep.subr.bf16.mxu0 0
    %383 = vmatpush1.bf16.msra.mxu0 %v367
    %384 = vmatprep.subr.bf16.mxu0 0
    %385 = vmatpush1.bf16.msra.mxu0 %v366
    %386 = vmatprep.subr.bf16.mxu0 0
    %387 = vmatpush1.bf16.msra.mxu0 %v365
    %388 = vmatprep.subr.bf16.mxu0 0
    %389 = vmatpush1.bf16.msra.mxu0 %v364
    %390 = vmatprep.subr.bf16.mxu0 0
    %391 = vmatpush1.bf16.msra.mxu0 %v363
    %392 = vmatprep.subr.bf16.mxu0 0
    %393 = vmatpush1.bf16.msra.mxu0 %v362
    %394 = vmatprep.subr.bf16.mxu0 0
    %395 = vmatpush2.bf16.msra.mxu0 0
    %396 = vmatprep.subr.bf16.mxu0 0
    %397 = vmatpush2.bf16.msra.mxu0 0
    %398 = vmatprep.subr.bf16.mxu0 0
    %399 = vmatpush2.bf16.msra.mxu0 0
    %400 = vmatprep.subr.bf16.mxu0 0
    %401 = vmatpush2.bf16.msra.mxu0 0
    %402 = vmatprep.subr.bf16.mxu0 0
    %403 = vmatpush2.bf16.msra.mxu0 0
    %404 = vmatprep.subr.bf16.mxu0 0
    %405 = vmatpush2.bf16.msra.mxu0 0
    %406 = vmatprep.subr.bf16.mxu0 0
    %407 = vmatpush2.bf16.msra.mxu0 0
    %408 = vmatprep.subr.bf16.mxu0 0
    %409 = vmatpush2.bf16.msra.mxu0 0
    %410 = vmatprep.mubr.bf16.mxu0 0
    %411 = vmatmul.mubr.bf16.gmra.mxu0 %v303
    %v412 = vpop.f32.mrf.mxu0
    %v413 = vadd.f32 %v328, %v412
    %v414 = vpop.f32.mrf.mxu0
    %v415 = vpop.f32.mrf.mxu0
    %v416 = vadd.f32 %v328, %v415
    %v417 = vpop.f32.mrf.mxu0
    %418 = vmatprep.mubr.bf16.mxu0 0
    %419 = vmatmul.mubr.bf16.gmra.mxu0 %v304
    %v420 = vpop.f32.mrf.mxu0
    %v421 = vadd.f32 %v328, %v420
    %v422 = vpop.f32.mrf.mxu0
    %v423 = vpop.f32.mrf.mxu0
    %v424 = vadd.f32 %v328, %v423
    %v425 = vpop.f32.mrf.mxu0
    %426 = vmatprep.mubr.bf16.mxu0 0
    %427 = vmatmul.mubr.bf16.gmra.mxu0 %v305
    %v428 = vpop.f32.mrf.mxu0
    %v429 = vadd.f32 %v328, %v428
    %v430 = vpop.f32.mrf.mxu0
    %v431 = vpop.f32.mrf.mxu0
    %v432 = vadd.f32 %v328, %v431
    %v433 = vpop.f32.mrf.mxu0
    %434 = vmatprep.mubr.bf16.mxu0 0
    %435 = vmatmul.mubr.bf16.gmra.mxu0 %v306
    %v436 = vpop.f32.mrf.mxu0
    %v437 = vadd.f32 %v328, %v436
    %v438 = vpop.f32.mrf.mxu0
    %v439 = vpop.f32.mrf.mxu0
    %v440 = vadd.f32 %v328, %v439
    %v441 = vpop.f32.mrf.mxu0
    %442 = vdwg.mxu0
    %v443 = vmax.f32 %v413, %v429
    %v444 = vmax.f32 %v416, %v432
    %v445 = vmax.f32 %v421, %v437
    %v446 = vmax.f32 %v424, %v440
    %v447 = vmax.f32 %v443, %v444
    %v448 = vmax.f32 %v445, %v446
    %v449 = vmax.f32 %v447, %v448
    %v450 = vrot.slane %v449, 4
    %v451 = vmax.f32 %v449, %v450
    %v452 = vrot.slane %v451, 2
    %v453 = vmax.f32 %v451, %v452
    %v454 = vrot.slane %v453, 1
    %v455 = vmax.f32 %v453, %v454
    %v456 = vsub.f32 %v413, %v455
    %v457 = vsub.f32 %v416, %v455
    %v458 = vsub.f32 %v421, %v455
    %v459 = vsub.f32 %v424, %v455
    %v460 = vsub.f32 %v429, %v455
    %v461 = vsub.f32 %v432, %v455
    %v462 = vsub.f32 %v437, %v455
    %v463 = vsub.f32 %v440, %v455
    %v464 = vmul.f32 %v456, 1.442695
    %v465 = vpow.pop %v464
    %v466 = vmul.f32 %v457, 1.442695
    %v467 = vpow.pop %v466
    %v468 = vmul.f32 %v458, 1.442695
    %v469 = vpow.pop %v468
    %v470 = vmul.f32 %v459, 1.442695
    %v471 = vpow.pop %v470
    %v472 = vmul.f32 %v460, 1.442695
    %v473 = vpow.pop %v472
    %v474 = vmul.f32 %v461, 1.442695
    %v475 = vpow.pop %v474
    %v476 = vmul.f32 %v462, 1.442695
    %v477 = vpow.pop %v476
    %v478 = vmul.f32 %v463, 1.442695
    %v479 = vpow.pop %v478
    %v480 = vadd.f32 %v465, %v467
    %v481 = vadd.f32 %v480, %v469
    %v482 = vadd.f32 %v481, %v471
    %v483 = vadd.f32 %v482, %v473
    %v484 = vadd.f32 %v483, %v475
    %v485 = vadd.f32 %v484, %v477
    %v486 = vadd.f32 %v485, %v479
    %v487 = vrot.slane %v486, 4
    %v488 = vadd.f32 %v486, %v487
    %v489 = vrot.slane %v488, 2
    %v490 = vadd.f32 %v488, %v489
    %v491 = vrot.slane %v490, 1
    %v492 = vadd.f32 %v490, %v491
    %v493 = vrcp.pop %v492
    %v494 = vmul.f32 %v465, %v493
    %v495 = vmul.f32 %v467, %v493
    %v496 = vmul.f32 %v469, %v493
    %v497 = vmul.f32 %v471, %v493
    %v498 = vmul.f32 %v473, %v493
    %v499 = vmul.f32 %v475, %v493
    %v500 = vmul.f32 %v477, %v493
    %v501 = vmul.f32 %v479, %v493
    %502 = vst [vmem:[#allocation5] sm:$0xff] %v494
    %503 = vst [vmem:[#allocation5 + $0x8] sm:$0xff] %v495
    %504 = vst [vmem:[#allocation5 + $0x10] sm:$0xff] %v496
    %505 = vst [vmem:[#allocation5 + $0x18] sm:$0xff] %v497
    %506 = vst [vmem:[#allocation5 + $0x20] sm:$0xff] %v498
    %507 = vst [vmem:[#allocation5 + $0x28] sm:$0xff] %v499
    %508 = vst [vmem:[#allocation5 + $0x30] sm:$0xff] %v500
    %509 = vst [vmem:[#allocation5 + $0x38] sm:$0xff] %v501
    // Predicated region
    $region34: #{tpu_custom_call.1} parent=1 // pred_check
      _
    $region35: #{tpu_custom_call.1} parent=1 // pred_check_branch
      %511 = sbr.rel (0) target = $region37
    $region36: #{tpu_custom_call.1} parent=1 // pred_region
      %s513 = ssub.s32 1024, 1024
      %514 = vsyncadd [#allocation4], %s513
      %s515 = sshll.u32 [#allocation5], 4
      %s516 = int_to_ptr.vmem [resolvable:$true] %s515
      %521 = dma.vmem_to_hbm [thread:$0]  %s516, 1024, %s7, [#allocation4], 128, 128, 8
    $region37: #{tpu_custom_call.1} parent=1 // pred_fallthru
      _
    // Predicated region
    $region38: #{tpu_custom_call.1} parent=1 // pred_check
      _
    $region39: #{tpu_custom_call.1} parent=1 // pred_check_branch
      %523 = sbr.rel (0) target = $region41
    $region40: #{tpu_custom_call.1} parent=1 // pred_region
      %524 = dma.done [#allocation4], 1024
    $region41: #{tpu_custom_call.1} parent=1 // pred_fallthru
      _
    %525 = vsyncpa [#allocation3], 1
    %526 = vsyncpa [#allocation4], 1

</llo_original>
